<compile_context>
chip_gen: v7x
topology: tpu7x:2x2x1
jax: 0.10.0
libtpu: 0.0.40
codegen_flags: <defaults>
</compile_context>

<pallas_src>
import numpy as np
import jax
import jax.numpy as jnp
from jax import lax
from jax.experimental import pallas as pl
from jax.experimental.pallas import tpu as pltpu

# ----------------------------- model constants ------------------------------
NUM_CLASSES = 16          # dataset.num_classes()
NUM_ATTRIBUTES = 8        # dataset.num_attributes()
POOL_OH, POOL_OW = 4, 4   # nn.AdaptiveAvgPool2d((4, 4))
ROW_ALIGN = 16            # bf16 sublane packing
MAX_ROW_TILE = 512        # row tile for large N (stays well within VMEM)
VMEM_LIMIT = 32 * 1024 * 1024


# --------------------------- helpers (host / numpy) --------------------------
def adaptive_avgpool_matrix(H, W, oh=POOL_OH, ow=POOL_OW):
  """P of shape (H*W, oh*ow) s.t. x_flat @ P == AdaptiveAvgPool2d((oh, ow))."""
  P = np.zeros((H * W, oh * ow), dtype=np.float32)
  for i in range(oh):
    hs, he = (i * H) // oh, -((-(i + 1) * H) // oh)
    for j in range(ow):
      ws, we = (j * W) // ow, -((-(j + 1) * W) // ow)
      cnt = float((he - hs) * (we - ws))
      for h in range(hs, he):
        for w in range(ws, we):
          P[h * W + w, i * ow + j] = 1.0 / cnt
  return P


def _round_up(x, m):
  return ((x + m - 1) // m) * m


# ------------------------------ Pallas kernels -------------------------------
def eval_kernel(x_ref, w_ref, add_ref, prob_ref):
  """probs = sigmoid(x @ W_fused + (w_cls[label] + bias)); lane-dense (.., 128)."""
  logits = jnp.dot(x_ref[...], w_ref[...], preferred_element_type=jnp.float32)
  logits = logits + add_ref[...]
  prob_ref[...] = jax.nn.sigmoid(logits)


def make_train_kernel(tile_n, n_valid, a_valid, inv_count):
  """Fused logits + MultiLabelSoftMarginLoss (mean over classes, then batch).

  Uses per-element BCE-with-logits identity:
    -[y*log_sigmoid(x) + (1-y)*log_sigmoid(-x)] == softplus(x) - y*x
  with stable softplus(x) = max(x, 0) + log(1 + exp(-|x|)).
  """

  def train_kernel(x_ref, w_ref, add_ref, tgt_ref, loss_ref):
    i = pl.program_id(0)
    logits = jnp.dot(x_ref[...], w_ref[...], preferred_element_type=jnp.float32)
    logits = logits + add_ref[...]
    y = tgt_ref[...]
    sp = jnp.maximum(logits, 0.0) + jnp.log(1.0 + jnp.exp(-jnp.abs(logits)))
    per = sp - y * logits
    # Mask out padded rows / padded attribute lanes.
    row_ids = i * tile_n + lax.broadcasted_iota(jnp.int32, per.shape, 0)
    col_ids = lax.broadcasted_iota(jnp.int32, per.shape, 1)
    mask = (row_ids < n_valid) & (col_ids < a_valid)
    partial = jnp.sum(jnp.where(mask, per, 0.0)) * inv_count

    @pl.when(i == 0)
    def _():
      loss_ref[0, 0] = 0.0

    loss_ref[0, 0] += partial

  return train_kernel


# ------------------------------- model wrapper --------------------------------
class AttributesModelPallas:
  def __init__(self, num_classes=NUM_CLASSES, num_attributes=NUM_ATTRIBUTES,
               region_channels=4, seed=0):
    self.num_classes = num_classes
    self.num_attributes = num_attributes
    self.region_channels = region_channels
    self.a_pad = _round_up(max(num_attributes, 1), 128)   # lane-dense attr axis

    feat_dim = region_channels * POOL_OH * POOL_OW
    k1, k2 = jax.random.split(jax.random.PRNGKey(seed))
    # deterministic synthetic linear head: [pooled_feat | one_hot] -> attributes
    self.w_feat = (0.05 * jax.random.normal(k1, (feat_dim, num_attributes))
                   ).astype(jnp.float32)
    self.w_cls = (0.05 * jax.random.normal(k2, (num_classes, num_attributes))
                  ).astype(jnp.float32)
    self.bias = jnp.zeros((num_attributes,), jnp.float32)

    # Class contribution + bias (== one_hot @ w_cls + bias), gathered per label,
    # zero-padded to the lane-dense attribute width. Device-resident, reused.
    wcb = self.w_cls + self.bias[None, :]
    self.w_cls_bias_padded = jnp.pad(
        wcb, ((0, 0), (0, self.a_pad - num_attributes)))

    # (C,H,W) -> bf16 fused weight (pool matrix folded into w_feat), cached.
    self._fused_w_cache = {}

  # ---- fold AdaptiveAvgPool2d((4,4)) into the head weight (once per shape) ----
  def _fused_weight(self, C, H, W):
    key = (C, H, W)
    w = self._fused_w_cache.get(key)
    if w is None:
      P = adaptive_avgpool_matrix(H, W)                       # (H*W, 16)
      wf = np.asarray(self.w_feat).reshape(
          C, POOL_OH * POOL_OW, self.num_attributes)          # (C, 16, A)
      fused = np.einsum("hp,cpa->cha", P, wf).reshape(
          C * H * W, self.num_attributes)                     # (C*H*W, A)
      fused = np.pad(fused, ((0, 0), (0, self.a_pad - self.num_attributes)))
      w = jnp.asarray(fused, dtype=jnp.bfloat16)
      self._fused_w_cache[key] = w
    return w

  # --------------------------- input staging (wrapper) -------------------------
  def _prepare(self, labels, pooled_regions):
    N, C, H, W = pooled_regions.shape
    K = C * H * W
    n_pad = _round_up(N, ROW_ALIGN)
    tile_n = min(n_pad, MAX_ROW_TILE)
    n_pad = _round_up(n_pad, tile_n)

    x = pooled_regions.reshape(N, K).astype(jnp.bfloat16)
    if n_pad > N:
      x = jnp.pad(x, ((0, n_pad - N), (0, 0)))

    labels_p = labels.astype(jnp.int32)
    if n_pad > N:
      labels_p = jnp.pad(labels_p, (0, n_pad - N))
    # Row gather (== one_hot @ w_cls + bias) — tiny XLA gather in the wrapper.
    add_term = self.w_cls_bias_padded[labels_p]               # (n_pad, a_pad) f32

    w = self._fused_weight(C, H, W)
    return x, w, add_term, N, K, n_pad, tile_n

  # --------------------------------- eval path --------------------------------
  def _eval_probs(self, x, w, add_term, K, n_pad, tile_n):
    grid = (n_pad // tile_n,)
    return pl.pallas_call(
        eval_kernel,
        grid=grid,
        in_specs=[
            pl.BlockSpec((tile_n, K), lambda i: (i, 0)),
            pl.BlockSpec((K, self.a_pad), lambda i: (0, 0)),
            pl.BlockSpec((tile_n, self.a_pad), lambda i: (i, 0)),
        ],
        out_specs=pl.BlockSpec((tile_n, self.a_pad), lambda i: (i, 0)),
        out_shape=jax.ShapeDtypeStruct((n_pad, self.a_pad), jnp.float32),
        compiler_params=pltpu.CompilerParams(
            dimension_semantics=("parallel",),
            vmem_limit_bytes=VMEM_LIMIT),
    )(x, w, add_term)

  # -------------------------------- train path --------------------------------
  def _train_loss(self, x, w, add_term, targets_attr, N, K, n_pad, tile_n):
    tgt = targets_attr.astype(jnp.float32)
    tgt = jnp.pad(tgt, ((0, n_pad - N),
                        (0, self.a_pad - self.num_attributes)))
    inv_count = 1.0 / float(N * self.num_attributes)
    kernel = make_train_kernel(tile_n, N, self.num_attributes, inv_count)
    loss = pl.pallas_call(
        kernel,
        grid=(n_pad // tile_n,),
        in_specs=[
            pl.BlockSpec((tile_n, K), lambda i: (i, 0)),
            pl.BlockSpec((K, self.a_pad), lambda i: (0, 0)),
            pl.BlockSpec((tile_n, self.a_pad), lambda i: (i, 0)),
            pl.BlockSpec((tile_n, self.a_pad), lambda i: (i, 0)),
        ],
        out_specs=pl.BlockSpec(memory_space=pltpu.MemorySpace.SMEM),
        out_shape=jax.ShapeDtypeStruct((1, 1), jnp.float32),
        compiler_params=pltpu.CompilerParams(
            dimension_semantics=("arbitrary",),
            vmem_limit_bytes=VMEM_LIMIT),
    )(x, w, add_term, tgt)
    return loss[0, 0]

  # --------------------------------- forward ----------------------------------
  def forward(self, boxes, labels, targets, img_features, pooled_regions,
              training=False):
    del boxes         # unused by the base-class computation
    del img_features  # TODO(synk): unused by the synthetic stand-in head.
    x, w, add_term, N, K, n_pad, tile_n = self._prepare(labels, pooled_regions)
    if training:
      return self._train_loss(x, w, add_term, targets["attributes"],
                              N, K, n_pad, tile_n)
    probs_padded = self._eval_probs(x, w, add_term, K, n_pad, tile_n)
    probs = probs_padded[:N, :self.num_attributes]
    # torch.sort(dim=1, descending=True) == top_k over the full attribute axis.
    attr_scores, attr_indexes = lax.top_k(probs, self.num_attributes)
    return {"attributes": attr_indexes, "attributes_scores": attr_scores}


# ----------------------------- pure-JAX reference -----------------------------
def reference_forward(model, pooled_regions, labels, targets_attr):
  N, C, H, W = pooled_regions.shape
  P = jnp.asarray(adaptive_avgpool_matrix(H, W))
  pooled = pooled_regions.reshape(N * C, H * W).astype(jnp.float32) @ P
  feat = pooled.reshape(N, C * POOL_OH * POOL_OW)
  one_hot = jax.nn.one_hot(labels, model.num_classes, dtype=jnp.float32)
  logits = feat @ model.w_feat + one_hot @ model.w_cls + model.bias[None, :]
  probs = jax.nn.sigmoid(logits)
  y = targets_attr.astype(jnp.float32)
  per = -(y * jax.nn.log_sigmoid(logits) + (1.0 - y) * jax.nn.log_sigmoid(-logits))
  return probs, jnp.mean(jnp.mean(per, axis=1))


# ----------------------------------- main ------------------------------------
if __name__ == "__main__":
  key = jax.random.PRNGKey(0)
  k_box, k_lab, k_tgt, k_img, k_reg = jax.random.split(key, 5)

  N_REGIONS, C, H, W = 8, 4, 8, 8
  boxes = jax.random.uniform(k_box, (N_REGIONS, 4), jnp.float32)
  labels = jax.random.randint(k_lab, (N_REGIONS,), 0, NUM_CLASSES, jnp.int32)
  targets = {"attributes": jax.random.bernoulli(
      k_tgt, 0.3, (N_REGIONS, NUM_ATTRIBUTES)).astype(jnp.int32)}
  img_features = jax.random.normal(k_img, (2, 4, 16, 16), jnp.float32)
  pooled_regions = jax.random.normal(k_reg, (N_REGIONS, C, H, W), jnp.float32)

  model = AttributesModelPallas(region_channels=C)

  # eval path (fused matmul + sigmoid kernel, then top_k == descending sort)
  out = model.forward(boxes, labels, targets, img_features, pooled_regions,
                      training=False)
  jax.block_until_ready(out["attributes_scores"])
  jax.block_until_ready(out["attributes"])

  # training path (fused matmul + MultiLabelSoftMarginLoss kernel)
  loss = model.forward(boxes, labels, targets, img_features, pooled_regions,
                       training=True)
  jax.block_until_ready(loss)

  # shape / sanity checks
  assert out["attributes"].shape == (N_REGIONS, NUM_ATTRIBUTES)
  assert out["attributes_scores"].shape == (N_REGIONS, NUM_ATTRIBUTES)
  assert bool(jnp.all(jnp.diff(out["attributes_scores"], axis=1) <= 1e-6))
  assert jnp.isfinite(loss)

  # numeric check vs. pure-JAX reference (bf16 MXU inputs => loose tolerance)
  ref_probs, ref_loss = reference_forward(model, pooled_regions, labels,
                                          targets["attributes"])
  ref_scores = -jnp.sort(-ref_probs, axis=1)
  assert float(jnp.max(jnp.abs(out["attributes_scores"] - ref_scores))) < 2e-2
  assert abs(float(loss) - float(ref_loss)) < 2e-2

  print("KERNEL_OK")
</pallas_src>

<mosaic_0001>
module attributes {stable_mosaic.version = 11 : i64} {
  func.func @eval_kernel(%arg0: i32, %arg1: memref<16x256xbf16, #tpu.memory_space<vmem>>, %arg2: memref<256x128xbf16, #tpu.memory_space<vmem>>, %arg3: memref<16x128xf32, #tpu.memory_space<vmem>>, %arg4: memref<16x128xf32, #tpu.memory_space<vmem>>) attributes {dimension_semantics = [#tpu.dimension_semantics<parallel>], iteration_bounds = array<i64: 1>, scalar_prefetch = 0 : i64, scratch_operands = 0 : i64, tpu.core_type = #tpu.core_type<tc>, window_params = [{transform_indices = @transform_0, window_bounds = array<i64: 16, 256>}, {pipeline_mode = #tpu.pipeline_mode<synchronous>, transform_indices = @transform_1, window_bounds = array<i64: 256, 128>}, {transform_indices = @transform_2, window_bounds = array<i64: 16, 128>}, {transform_indices = @transform_3, window_bounds = array<i64: 16, 128>}]} {
    %c0 = arith.constant 0 : index
    %c0_0 = arith.constant 0 : index
    %0 = vector.load %arg1[%c0, %c0_0] : memref<16x256xbf16, #tpu.memory_space<vmem>>, vector<16x256xbf16>
    %c0_1 = arith.constant 0 : index
    %c0_2 = arith.constant 0 : index
    %1 = vector.load %arg2[%c0_1, %c0_2] : memref<256x128xbf16, #tpu.memory_space<vmem>>, vector<256x128xbf16>
    %cst = arith.constant dense<0.000000e+00> : vector<16x128xf32>
    %2 = tpu.matmul %0, %1, %cst {dimension_numbers = #tpu.dot_dimension_numbers<[1], [0], [0], [1], [0, 0, 1, 1], [], []>} : vector<16x256xbf16>, vector<256x128xbf16>, vector<16x128xf32> -> vector<16x128xf32>
    %c0_3 = arith.constant 0 : index
    %c0_4 = arith.constant 0 : index
    %3 = vector.load %arg3[%c0_3, %c0_4] : memref<16x128xf32, #tpu.memory_space<vmem>>, vector<16x128xf32>
    %4 = arith.addf %2, %3 : vector<16x128xf32>
    %5 = arith.negf %4 : vector<16x128xf32>
    %6 = math.exp %5 : vector<16x128xf32>
    %cst_5 = arith.constant 1.000000e+00 : f32
    %7 = vector.broadcast %cst_5 : f32 to vector<16x128xf32>
    %8 = arith.addf %7, %6 : vector<16x128xf32>
    %9 = arith.divf %7, %8 : vector<16x128xf32>
    %c0_6 = arith.constant 0 : index
    %c0_7 = arith.constant 0 : index
    %10 = vector.load %arg4[%c0_6, %c0_7] : memref<16x128xf32, #tpu.memory_space<vmem>>, vector<16x128xf32>
    tpu.vector_store %arg4[%c0_6, %c0_7], %9 {strides = array<i32>} : memref<16x128xf32, #tpu.memory_space<vmem>>, vector<16x128xf32>,
    return
  }
  func.func @transform_0(%arg0: i32) -> (i32, i32) {
    %c0_i32 = arith.constant 0 : i32
    %c0_i32_0 = arith.constant 0 : i32
    return %arg0, %c0_i32 : i32, i32
  }
  func.func @transform_1(%arg0: i32) -> (i32, i32) {
    %c0_i32 = arith.constant 0 : i32
    %c0_i32_0 = arith.constant 0 : i32
    %c0_i32_1 = arith.constant 0 : i32
    return %c0_i32, %c0_i32_0 : i32, i32
  }
  func.func @transform_2(%arg0: i32) -> (i32, i32) {
    %c0_i32 = arith.constant 0 : i32
    %c0_i32_0 = arith.constant 0 : i32
    return %arg0, %c0_i32 : i32, i32
  }
  func.func @transform_3(%arg0: i32) -> (i32, i32) {
    %c0_i32 = arith.constant 0 : i32
    %c0_i32_0 = arith.constant 0 : i32
    return %arg0, %c0_i32 : i32, i32
  }
}

</mosaic_0001>

<llo_original>
// kernel: tpu_custom_call.1
$region0: #{tpu_custom_call.1}
  #allocation0 [shape = 'u32[]', space=smem, size = 0x4, offset = 0x4, fixed_abs, tag = 'smem constant byte address 0x4 - core index']
  #allocation1 [shape = 'u32[144,128]{1,0:T(1,128)}', space=vmem, size = 0x12000, scoped, tag = 'internal scratch']
  %s0 = inlined_call_operand.hbm [shape: bf16[16,256], index: 0, kind: input, shape index: {}]
  %s1 = inlined_call_operand.hbm [shape: bf16[256,128], index: 1, kind: input, shape index: {}]
  %s2 = inlined_call_operand.hbm [shape: f32[16,128], index: 2, kind: input, shape index: {}]
  %s3 = inlined_call_operand.hbm [shape: f32[16,128], index: 3, kind: output, shape index: {}]
  %s4 = sld [smem:[#allocation0]]
  $region34: #{tpu_custom_call.1} parent=0
    _
  %s6 = ssub.s32 1, %s4
  %s7 = scalar_select 0, %s6, %s4
  $region1: #{tpu_custom_call.1} parent=0
    #allocation2 [shape = 'u8[8192]{0}', space=vmem, size = 0x2000, scoped, tag = 'input window, operand 0, single buffered']
    #allocation3 [shape = 's32[1]{0}', space=sflag, size = 0x4, scoped, tag = 'scoped memory for tpu_custom_call.1']
    #allocation4 [shape = 's32[1]{0}', space=sflag, size = 0x4, scoped, tag = 'scoped memory for tpu_custom_call.1']
    #allocation5 [shape = 'u8[65536]{0}', space=vmem, size = 0x10000, scoped, tag = 'input window, operand 1, single buffered']
    #allocation6 [shape = 's32[1]{0}', space=sflag, size = 0x4, scoped, tag = 'scoped memory for tpu_custom_call.1']
    #allocation7 [shape = 'u8[8192]{0}', space=vmem, size = 0x2000, scoped, tag = 'input window, operand 2, single buffered']
    #allocation8 [shape = 'u8[8192]{0}', space=vmem, size = 0x2000, scoped, tag = 'output window, operand 0, single buffered']
    %8 = vsyncpa [#allocation3], 0
    %9 = vsyncpa [#allocation6], 0
    %10 = vsyncpa [#allocation4], 0
    // Predicated region
    $region2: #{tpu_custom_call.1} parent=1 // pred_check
      _
    $region3: #{tpu_custom_call.1} parent=1 // pred_check_branch
      %12 = sbr.rel (0) target = $region5
    $region4: #{tpu_custom_call.1} parent=1 // pred_region
      %s14 = ssub.s32 256, 256
      %15 = vsyncadd [#allocation3], %s14
      %s16 = sshll.u32 [#allocation2], 4
      %s17 = int_to_ptr.vmem [resolvable:$true] %s16
      %22 = dma.hbm_to_vmem [thread:$0]  %s0, 256, %s17, [#allocation3], 128, 128, 8
    $region5: #{tpu_custom_call.1} parent=1 // pred_fallthru
      _
    // Predicated region
    $region6: #{tpu_custom_call.1} parent=1 // pred_check
      _
    $region7: #{tpu_custom_call.1} parent=1 // pred_check_branch
      %24 = sbr.rel (0) target = $region9
    $region8: #{tpu_custom_call.1} parent=1 // pred_region
      %s26 = ssub.s32 2048, 2048
      %27 = vsyncadd [#allocation6], %s26
      %s28 = sshll.u32 [#allocation5], 4
      %s29 = int_to_ptr.vmem [resolvable:$true] %s28
      %34 = dma.hbm_to_vmem [thread:$0]  %s1, 2048, %s29, [#allocation6], 64, 64, 4
    $region9: #{tpu_custom_call.1} parent=1 // pred_fallthru
      _
    // Predicated region
    $region10: #{tpu_custom_call.1} parent=1 // pred_check
      _
    $region11: #{tpu_custom_call.1} parent=1 // pred_check_branch
      %36 = sbr.rel (0) target = $region13
    $region12: #{tpu_custom_call.1} parent=1 // pred_region
      %s38 = ssub.s32 256, 256
      %39 = vsyncadd [#allocation6], %s38
      %s40 = sshll.u32 [#allocation7], 4
      %s41 = int_to_ptr.vmem [resolvable:$true] %s40
      %46 = dma.hbm_to_vmem [thread:$0]  %s2, 256, %s41, [#allocation6], 128, 128, 8
    $region13: #{tpu_custom_call.1} parent=1 // pred_fallthru
      _
    // Predicated region
    $region14: #{tpu_custom_call.1} parent=1 // pred_check
      _
    $region15: #{tpu_custom_call.1} parent=1 // pred_check_branch
      %48 = sbr.rel (0) target = $region17
    $region16: #{tpu_custom_call.1} parent=1 // pred_region
      %49 = dma.done [#allocation3], 256
    $region17: #{tpu_custom_call.1} parent=1 // pred_fallthru
      _
    // Predicated region
    $region18: #{tpu_custom_call.1} parent=1 // pred_check
      _
    $region19: #{tpu_custom_call.1} parent=1 // pred_check_branch
      %51 = sbr.rel (0) target = $region21
    $region20: #{tpu_custom_call.1} parent=1 // pred_region
      %52 = dma.done [#allocation6], 2048
    $region21: #{tpu_custom_call.1} parent=1 // pred_fallthru
      _
    // Predicated region
    $region22: #{tpu_custom_call.1} parent=1 // pred_check
      _
    $region23: #{tpu_custom_call.1} parent=1 // pred_check_branch
      %54 = sbr.rel (0) target = $region25
    $region24: #{tpu_custom_call.1} parent=1 // pred_region
      %55 = dma.done [#allocation6], 256
    $region25: #{tpu_custom_call.1} parent=1 // pred_fallthru
      _
    %v57 = vld [vmem:[#allocation2] sm:$0xff]
    %v58 = vld [vmem:[#allocation2 + $0x8] sm:$0xff]
    %v59 = vld [vmem:[#allocation5] sm:$0xf]
    %v60 = vld [vmem:[#allocation5 + $0x4] sm:$0xf]
    %v61 = vld [vmem:[#allocation5 + $0x8] sm:$0xf]
    %v62 = vld [vmem:[#allocation5 + $0xc] sm:$0xf]
    %v63 = vld [vmem:[#allocation5 + $0x10] sm:$0xf]
    %v64 = vld [vmem:[#allocation5 + $0x14] sm:$0xf]
    %v65 = vld [vmem:[#allocation5 + $0x18] sm:$0xf]
    %v66 = vld [vmem:[#allocation5 + $0x1c] sm:$0xf]
    %v67 = vld [vmem:[#allocation5 + $0x20] sm:$0xf]
    %v68 = vld [vmem:[#allocation5 + $0x24] sm:$0xf]
    %v69 = vld [vmem:[#allocation5 + $0x28] sm:$0xf]
    %v70 = vld [vmem:[#allocation5 + $0x2c] sm:$0xf]
    %v71 = vld [vmem:[#allocation5 + $0x30] sm:$0xf]
    %v72 = vld [vmem:[#allocation5 + $0x34] sm:$0xf]
    %v73 = vld [vmem:[#allocation5 + $0x38] sm:$0xf]
    %v74 = vld [vmem:[#allocation5 + $0x3c] sm:$0xf]
    %v75 = vld [vmem:[#allocation5 + $0x40] sm:$0xf]
    %v76 = vld [vmem:[#allocation5 + $0x44] sm:$0xf]
    %v77 = vld [vmem:[#allocation5 + $0x48] sm:$0xf]
    %v78 = vld [vmem:[#allocation5 + $0x4c] sm:$0xf]
    %v79 = vld [vmem:[#allocation5 + $0x50] sm:$0xf]
    %v80 = vld [vmem:[#allocation5 + $0x54] sm:$0xf]
    %v81 = vld [vmem:[#allocation5 + $0x58] sm:$0xf]
    %v82 = vld [vmem:[#allocation5 + $0x5c] sm:$0xf]
    %v83 = vld [vmem:[#allocation5 + $0x60] sm:$0xf]
    %v84 = vld [vmem:[#allocation5 + $0x64] sm:$0xf]
    %v85 = vld [vmem:[#allocation5 + $0x68] sm:$0xf]
    %v86 = vld [vmem:[#allocation5 + $0x6c] sm:$0xf]
    %v87 = vld [vmem:[#allocation5 + $0x70] sm:$0xf]
    %v88 = vld [vmem:[#allocation5 + $0x74] sm:$0xf]
    %v89 = vld [vmem:[#allocation5 + $0x78] sm:$0xf]
    %v90 = vld [vmem:[#allocation5 + $0x7c] sm:$0xf]
    %v91 = vld [vmem:[#allocation7] sm:$0xff]
    %v92 = vld [vmem:[#allocation7 + $0x8] sm:$0xff]
    %v95 = vunpack.c.l.b16 %v57
    %v96 = vunpack.c.h.b16 %v57
    %v97 = vunpack.c.l.b16 %v58
    %v98 = vunpack.c.h.b16 %v58
    %v99 = vpack.c.b16 %v97, %v95
    %v100 = vpack.c.b16 %v98, %v96
    %v135 = vunpack.c.l.b16 %v59
    %v136 = vunpack.c.l.b16 %v60
    %v137 = vunpack.c.l.b16 %v61
    %v138 = vunpack.c.l.b16 %v62
    %v139 = vunpack.c.l.b16 %v63
    %v140 = vunpack.c.l.b16 %v64
    %v141 = vunpack.c.l.b16 %v65
    %v142 = vunpack.c.l.b16 %v66
    %v143 = vunpack.c.l.b16 %v67
    %v144 = vunpack.c.l.b16 %v68
    %v145 = vunpack.c.l.b16 %v69
    %v146 = vunpack.c.l.b16 %v70
    %v147 = vunpack.c.l.b16 %v71
    %v148 = vunpack.c.l.b16 %v72
    %v149 = vunpack.c.l.b16 %v73
    %v150 = vunpack.c.l.b16 %v74
    %v151 = vunpack.c.l.b16 %v75
    %v152 = vunpack.c.l.b16 %v76
    %v153 = vunpack.c.l.b16 %v77
    %v154 = vunpack.c.l.b16 %v78
    %v155 = vunpack.c.l.b16 %v79
    %v156 = vunpack.c.l.b16 %v80
    %v157 = vunpack.c.l.b16 %v81
    %v158 = vunpack.c.l.b16 %v82
    %v159 = vunpack.c.l.b16 %v83
    %v160 = vunpack.c.l.b16 %v84
    %v161 = vunpack.c.l.b16 %v85
    %v162 = vunpack.c.l.b16 %v86
    %v163 = vunpack.c.l.b16 %v87
    %v164 = vunpack.c.l.b16 %v88
    %v165 = vunpack.c.l.b16 %v89
    %v166 = vunpack.c.l.b16 %v90
    %v167 = vpack.c.b16 %v136, %v135
    %v168 = vpack.c.b16 %v138, %v137
    %v169 = vpack.c.b16 %v140, %v139
    %v170 = vpack.c.b16 %v142, %v141
    %v171 = vpack.c.b16 %v144, %v143
    %v172 = vpack.c.b16 %v146, %v145
    %v173 = vpack.c.b16 %v148, %v147
    %v174 = vpack.c.b16 %v150, %v149
    %v175 = vpack.c.b16 %v152, %v151
    %v176 = vpack.c.b16 %v154, %v153
    %v177 = vpack.c.b16 %v156, %v155
    %v178 = vpack.c.b16 %v158, %v157
    %v179 = vpack.c.b16 %v160, %v159
    %v180 = vpack.c.b16 %v162, %v161
    %v181 = vpack.c.b16 %v164, %v163
    %v182 = vpack.c.b16 %v166, %v165
    %199 = vmatprep.subr.bf16.mxu0 0
    %200 = vmatpush1.bf16.msra.mxu0 %v167
    %201 = vmatprep.subr.bf16.mxu0 0
    %202 = vmatpush1.bf16.msra.mxu0 %v168
    %203 = vmatprep.subr.bf16.mxu0 0
    %204 = vmatpush1.bf16.msra.mxu0 %v169
    %205 = vmatprep.subr.bf16.mxu0 0
    %206 = vmatpush1.bf16.msra.mxu0 %v170
    %207 = vmatprep.subr.bf16.mxu0 0
    %208 = vmatpush1.bf16.msra.mxu0 %v171
    %209 = vmatprep.subr.bf16.mxu0 0
    %210 = vmatpush1.bf16.msra.mxu0 %v172
    %211 = vmatprep.subr.bf16.mxu0 0
    %212 = vmatpush1.bf16.msra.mxu0 %v173
    %213 = vmatprep.subr.bf16.mxu0 0
    %214 = vmatpush1.bf16.msra.mxu0 %v174
    %215 = vmatprep.subr.bf16.mxu0 0
    %216 = vmatpush1.bf16.msra.mxu0 %v175
    %217 = vmatprep.subr.bf16.mxu0 0
    %218 = vmatpush1.bf16.msra.mxu0 %v176
    %219 = vmatprep.subr.bf16.mxu0 0
    %220 = vmatpush1.bf16.msra.mxu0 %v177
    %221 = vmatprep.subr.bf16.mxu0 0
    %222 = vmatpush1.bf16.msra.mxu0 %v178
    %223 = vmatprep.subr.bf16.mxu0 0
    %224 = vmatpush1.bf16.msra.mxu0 %v179
    %225 = vmatprep.subr.bf16.mxu0 0
    %226 = vmatpush1.bf16.msra.mxu0 %v180
    %227 = vmatprep.subr.bf16.mxu0 0
    %228 = vmatpush1.bf16.msra.mxu0 %v181
    %229 = vmatprep.subr.bf16.mxu0 0
    %230 = vmatpush1.bf16.msra.mxu0 %v182
    %231 = vmatprep.mubr.bf16.mxu0 %v100
    %232 = vmatmul.mubr.bf16.gmra.mrb[0].mxu0 %v99
    %v233 = vpop.f32.mrb[0].mxu0
    %v234 = vadd.f32 %v91, %v233
    %v235 = vpop.f32.mrb[0].mxu0
    %v236 = vpop.f32.mrb[0].mxu0
    %v237 = vadd.f32 %v92, %v236
    %v238 = vpop.f32.mrb[0].mxu0
    %239 = vdwg.mxu0
    %v240 = vxor.u32 %v234, 2147483648
    %v241 = vxor.u32 %v237, 2147483648
    %v242 = vmul.f32 %v240, 1.442695
    %v243 = vpow.pop %v242
    %v244 = vmul.f32 %v241, 1.442695
    %v245 = vpow.pop %v244
    %v246 = vadd.f32 %v243, 1.0
    %v247 = vadd.f32 %v245, 1.0
    %v248 = vrcp.pop %v246
    %v249 = vmul.f32 1.0, %v248
    %v250 = vrcp.pop %v247
    %v251 = vmul.f32 1.0, %v250
    %252 = vst [vmem:[#allocation8] sm:$0xff] %v249
    %253 = vst [vmem:[#allocation8 + $0x8] sm:$0xff] %v251
    // Predicated region
    $region26: #{tpu_custom_call.1} parent=1 // pred_check
      _
    $region27: #{tpu_custom_call.1} parent=1 // pred_check_branch
      %255 = sbr.rel (0) target = $region29
    $region28: #{tpu_custom_call.1} parent=1 // pred_region
      %s257 = ssub.s32 256, 256
      %258 = vsyncadd [#allocation4], %s257
      %s259 = sshll.u32 [#allocation8], 4
      %s260 = int_to_ptr.vmem [resolvable:$true] %s259
      %265 = dma.vmem_to_hbm [thread:$0]  %s260, 256, %s3, [#allocation4], 128, 128, 8
    $region29: #{tpu_custom_call.1} parent=1 // pred_fallthru
      _
    // Predicated region
    $region30: #{tpu_custom_call.1} parent=1 // pred_check
      _
    $region31: #{tpu_custom_call.1} parent=1 // pred_check_branch
      %267 = sbr.rel (0) target = $region33
    $region32: #{tpu_custom_call.1} parent=1 // pred_region
      %268 = dma.done [#allocation4], 256
    $region33: #{tpu_custom_call.1} parent=1 // pred_fallthru
      _
    %269 = vsyncpa [#allocation3], 1
    %270 = vsyncpa [#allocation6], 1
    %271 = vsyncpa [#allocation4], 1

</llo_original>
